<compile_context>
chip_gen: v7x
topology: tpu7x:2x2x1
jax: 0.10.0
libtpu: 0.0.40
codegen_flags: <defaults>
</compile_context>

<pallas_src>
import jax
import jax.numpy as jnp
import numpy as np
from jax import lax
from jax.experimental import pallas as pl
from jax.experimental.pallas import tpu as pltpu


def _make_kernel(Nb, C, Cout, H, W, K):
    HW = H * W
    pad = (K - 1) // 2

    def kernel(x_ref, dwmw_ref, dwb_ref, pww_ref, pwb_ref, o_ref):
        # x_ref:    (Nb, C, HW)     flattened NCHW activations (spatial on lanes)
        # dwmw_ref: (K*K, C, HW)    boundary-masked depthwise tap weights
        # dwb_ref:  (C, 1)          depthwise bias
        # pww_ref:  (Cout, C)       pointwise weights
        # pwb_ref:  (Cout, 1)       pointwise bias
        # o_ref:    (Nb, Cout, HW)  lane-dense output
        x = x_ref[...].astype(jnp.float32)

        # Depthwise conv: K*K shifted MACs.  Each tap shift is a lane rotation
        # of the flattened spatial axis; out-of-image (wrap) positions are
        # zeroed by the precomputed masked weights, which implements the
        # "same" zero padding without any padded slab in VMEM.
        acc = jnp.zeros((Nb, C, HW), jnp.float32)
        for kh in range(K):
            for kw in range(K):
                d = (kh - pad) * W + (kw - pad)  # flat spatial offset of this tap
                if d == 0:
                    shifted = x
                else:
                    # shifted[..., p] = x[..., (p + d) % HW]   (XLU)
                    shifted = pltpu.roll(x, shift=(-d) % HW, axis=2)
                acc = acc + shifted * dwmw_ref[kh * K + kw].astype(jnp.float32)
        acc = acc + dwb_ref[...].astype(jnp.float32)[None, :, :]

        # Pointwise 1x1 conv as (Cout, C) @ (C, HW) on the MXU: the result's
        # lane dim is HW (multiple of 128/256) and feeds the lane-dense store.
        pww = pww_ref[...].astype(jnp.float32)
        pwb = pwb_ref[...].astype(jnp.float32)
        for i in range(Nb):
            out_i = jnp.dot(pww, acc[i], preferred_element_type=jnp.float32) + pwb
            o_ref[i] = out_i.astype(o_ref.dtype)

    return kernel


def _pick_batch_block(N):
    # Largest divisor of N (<= 8 images/step) that keeps >= 2 grid steps so the
    # batch axis can still be split across TensorCores (v7x megacore).
    nb = 1
    for cand in range(1, min(N, 8) + 1):
        if N % cand == 0 and N // cand >= 2:
            nb = cand
    return nb


def separable_conv2d(x_nchw, dw_weight, dw_bias, pw_weight, pw_bias,
                     batch_block=None):
    """SeparableConvNd(dim=2) forward.  x_nchw: (N, C, H, W), odd kernel_size."""
    N, C, H, W = x_nchw.shape
    K = dw_weight.shape[-1]
    Cout = pw_weight.shape[0]
    HW = H * W
    pad = (K - 1) // 2
    # TODO(synk): even kernel_size with padding=(K-1)//2 shrinks PyTorch's
    # output to (H-1, W-1); only odd K is implemented here.
    assert K % 2 == 1, "only odd kernel_size supported"

    if batch_block is None:
        batch_block = _pick_batch_block(N)
    assert N % batch_block == 0

    # ---- glue: shape-only reshapes (no transpose, no pad, no extra HBM pass)
    x_flat = x_nchw.reshape(N, C, HW)

    # Per-tap validity masks (static, numpy): mask[t, i*W+j] = 1 iff the tap
    # (kh, kw) reads an in-image pixel for output position (i, j).
    masks = np.zeros((K * K, HW), np.float32)
    rows = np.arange(H)
    cols = np.arange(W)
    for kh in range(K):
        for kw in range(K):
            dh, dwc = kh - pad, kw - pad
            vr = (rows + dh >= 0) & (rows + dh < H)
            vc = (cols + dwc >= 0) & (cols + dwc < W)
            masks[kh * K + kw] = (vr[:, None] & vc[None, :]).reshape(HW).astype(np.float32)

    dw_taps = jnp.transpose(dw_weight[:, 0, :, :].reshape(C, K * K), (1, 0))  # (K*K, C)
    dwmw = dw_taps.astype(jnp.float32)[:, :, None] * jnp.asarray(masks)[:, None, :]
    dwb = dw_bias.reshape(C, 1)
    pww = pw_weight[:, :, 0, 0]                                               # (Cout, C)
    pwb = pw_bias.reshape(Cout, 1)

    grid = (N // batch_block,)
    kernel = _make_kernel(batch_block, C, Cout, H, W, K)

    flops = 2 * N * HW * C * (K * K + Cout)
    bytes_accessed = 4 * (N * C * HW + N * Cout * HW + K * K * C * HW
                          + C + Cout * C + Cout)

    out_flat = pl.pallas_call(
        kernel,
        out_shape=jax.ShapeDtypeStruct((N, Cout, HW), x_nchw.dtype),
        grid_spec=pltpu.PrefetchScalarGridSpec(
            num_scalar_prefetch=0,
            grid=grid,
            in_specs=[
                pl.BlockSpec((batch_block, C, HW), lambda n: (n, 0, 0)),
                pl.BlockSpec((K * K, C, HW), lambda n: (0, 0, 0)),
                pl.BlockSpec((C, 1), lambda n: (0, 0)),
                pl.BlockSpec((Cout, C), lambda n: (0, 0)),
                pl.BlockSpec((Cout, 1), lambda n: (0, 0)),
            ],
            out_specs=pl.BlockSpec((batch_block, Cout, HW),
                                   lambda n: (n, 0, 0)),
        ),
        compiler_params=pltpu.CompilerParams(
            dimension_semantics=("parallel",)),
        cost_estimate=pl.CostEstimate(
            flops=flops, transcendentals=0, bytes_accessed=bytes_accessed),
    )(x_flat, dwmw, dwb, pww, pwb)

    # (N, Cout, H*W) -> NCHW is a free reshape (no transpose, no HBM pass).
    return out_flat.reshape(N, Cout, H, W)


def _reference(x, dw_w, dw_b, pw_w, pw_b):
    C = x.shape[1]
    K = dw_w.shape[-1]
    pad = (K - 1) // 2
    dn = ("NCHW", "OIHW", "NCHW")
    h = lax.conv_general_dilated(
        x, dw_w, window_strides=(1, 1), padding=((pad, pad), (pad, pad)),
        feature_group_count=C, dimension_numbers=dn)
    h = h + dw_b.reshape(1, -1, 1, 1)
    o = lax.conv_general_dilated(
        h, pw_w, window_strides=(1, 1), padding=((0, 0), (0, 0)),
        dimension_numbers=dn)
    return o + pw_b.reshape(1, -1, 1, 1)


if __name__ == "__main__":
    # Module config: in_channels=4, out_channels=8, kernel_size=3, dim=2.
    N, C, H, W = 2, 4, 16, 16
    Cout, K = 8, 3

    key = jax.random.PRNGKey(0)
    kx, k1, k2, k3, k4 = jax.random.split(key, 5)

    x = jax.random.normal(kx, (N, C, H, W), jnp.float32)

    # Deterministic parameter init (emulates timm trunc_normal_ for weights,
    # small uniform for conv biases).
    dw_weight = jax.random.truncated_normal(k1, -2.0, 2.0, (C, 1, K, K),
                                            jnp.float32)
    dw_bias = jax.random.uniform(k2, (C,), jnp.float32, -0.1, 0.1)
    pw_weight = jax.random.truncated_normal(k3, -2.0, 2.0, (Cout, C, 1, 1),
                                            jnp.float32)
    pw_bias = jax.random.uniform(k4, (Cout,), jnp.float32, -0.1, 0.1)

    out = separable_conv2d(x, dw_weight, dw_bias, pw_weight, pw_bias)
    out = jax.block_until_ready(out)

    ref = _reference(x, dw_weight, dw_bias, pw_weight, pw_bias)
    assert out.shape == (N, Cout, H, W)
    assert jnp.allclose(out, ref, rtol=1e-3, atol=1e-3), "mismatch vs reference"

    print("KERNEL_OK")
</pallas_src>

<mosaic_0001>
module attributes {stable_mosaic.version = 11 : i64} {
  func.func @kernel(%arg0: i32, %arg1: memref<1x4x256xf32, #tpu.memory_space<vmem>>, %arg2: memref<9x4x256xf32, #tpu.memory_space<vmem>>, %arg3: memref<4x1xf32, #tpu.memory_space<vmem>>, %arg4: memref<8x4xf32, #tpu.memory_space<vmem>>, %arg5: memref<8x1xf32, #tpu.memory_space<vmem>>, %arg6: memref<1x8x256xf32, #tpu.memory_space<vmem>>) attributes {dimension_semantics = [#tpu.dimension_semantics<parallel>], iteration_bounds = array<i64: 2>, scalar_prefetch = 0 : i64, scratch_operands = 0 : i64, tpu.core_type = #tpu.core_type<tc>, window_params = [{transform_indices = @transform_0, window_bounds = array<i64: 1, 4, 256>}, {pipeline_mode = #tpu.pipeline_mode<synchronous>, transform_indices = @transform_1, window_bounds = array<i64: 9, 4, 256>}, {pipeline_mode = #tpu.pipeline_mode<synchronous>, transform_indices = @transform_2, window_bounds = array<i64: 4, 1>}, {pipeline_mode = #tpu.pipeline_mode<synchronous>, transform_indices = @transform_3, window_bounds = array<i64: 8, 4>}, {pipeline_mode = #tpu.pipeline_mode<synchronous>, transform_indices = @transform_4, window_bounds = array<i64: 8, 1>}, {transform_indices = @transform_5, window_bounds = array<i64: 1, 8, 256>}]} {
    %c0 = arith.constant 0 : index
    %c0_0 = arith.constant 0 : index
    %c0_1 = arith.constant 0 : index
    %0 = vector.load %arg1[%c0, %c0_0, %c0_1] : memref<1x4x256xf32, #tpu.memory_space<vmem>>, vector<1x4x256xf32>
    %cst = arith.constant 0.000000e+00 : f32
    %1 = vector.broadcast %cst : f32 to vector<1x4x256xf32>
    %c17_i32 = arith.constant 17 : i32
    %2 = tpu.dynamic_rotate %0 by %c17_i32 dim 2 : vector<1x4x256xf32>, i32 -> vector<1x4x256xf32>
    %c0_2 = arith.constant 0 : index
    %c0_3 = arith.constant 0 : index
    %c0_4 = arith.constant 0 : index
    %3 = vector.load %arg2[%c0_2, %c0_3, %c0_4] : memref<9x4x256xf32, #tpu.memory_space<vmem>>, vector<1x4x256xf32>
    %4 = vector.shape_cast %3 : vector<1x4x256xf32> to vector<4x256xf32>
    %5 = vector.shape_cast %4 : vector<4x256xf32> to vector<1x4x256xf32>
    %6 = arith.mulf %2, %5 : vector<1x4x256xf32>
    %7 = arith.addf %1, %6 : vector<1x4x256xf32>
    %c16_i32 = arith.constant 16 : i32
    %8 = tpu.dynamic_rotate %0 by %c16_i32 dim 2 : vector<1x4x256xf32>, i32 -> vector<1x4x256xf32>
    %c1 = arith.constant 1 : index
    %c0_5 = arith.constant 0 : index
    %c0_6 = arith.constant 0 : index
    %9 = vector.load %arg2[%c1, %c0_5, %c0_6] : memref<9x4x256xf32, #tpu.memory_space<vmem>>, vector<1x4x256xf32>
    %10 = vector.shape_cast %9 : vector<1x4x256xf32> to vector<4x256xf32>
    %11 = vector.shape_cast %10 : vector<4x256xf32> to vector<1x4x256xf32>
    %12 = arith.mulf %8, %11 : vector<1x4x256xf32>
    %13 = arith.addf %7, %12 : vector<1x4x256xf32>
    %c15_i32 = arith.constant 15 : i32
    %14 = tpu.dynamic_rotate %0 by %c15_i32 dim 2 : vector<1x4x256xf32>, i32 -> vector<1x4x256xf32>
    %c2 = arith.constant 2 : index
    %c0_7 = arith.constant 0 : index
    %c0_8 = arith.constant 0 : index
    %15 = vector.load %arg2[%c2, %c0_7, %c0_8] : memref<9x4x256xf32, #tpu.memory_space<vmem>>, vector<1x4x256xf32>
    %16 = vector.shape_cast %15 : vector<1x4x256xf32> to vector<4x256xf32>
    %17 = vector.shape_cast %16 : vector<4x256xf32> to vector<1x4x256xf32>
    %18 = arith.mulf %14, %17 : vector<1x4x256xf32>
    %19 = arith.addf %13, %18 : vector<1x4x256xf32>
    %c1_i32 = arith.constant 1 : i32
    %20 = tpu.dynamic_rotate %0 by %c1_i32 dim 2 : vector<1x4x256xf32>, i32 -> vector<1x4x256xf32>
    %c3 = arith.constant 3 : index
    %c0_9 = arith.constant 0 : index
    %c0_10 = arith.constant 0 : index
    %21 = vector.load %arg2[%c3, %c0_9, %c0_10] : memref<9x4x256xf32, #tpu.memory_space<vmem>>, vector<1x4x256xf32>
    %22 = vector.shape_cast %21 : vector<1x4x256xf32> to vector<4x256xf32>
    %23 = vector.shape_cast %22 : vector<4x256xf32> to vector<1x4x256xf32>
    %24 = arith.mulf %20, %23 : vector<1x4x256xf32>
    %25 = arith.addf %19, %24 : vector<1x4x256xf32>
    %c4 = arith.constant 4 : index
    %c0_11 = arith.constant 0 : index
    %c0_12 = arith.constant 0 : index
    %26 = vector.load %arg2[%c4, %c0_11, %c0_12] : memref<9x4x256xf32, #tpu.memory_space<vmem>>, vector<1x4x256xf32>
    %27 = vector.shape_cast %26 : vector<1x4x256xf32> to vector<4x256xf32>
    %28 = vector.shape_cast %27 : vector<4x256xf32> to vector<1x4x256xf32>
    %29 = arith.mulf %0, %28 : vector<1x4x256xf32>
    %30 = arith.addf %25, %29 : vector<1x4x256xf32>
    %c255_i32 = arith.constant 255 : i32
    %31 = tpu.dynamic_rotate %0 by %c255_i32 dim 2 : vector<1x4x256xf32>, i32 -> vector<1x4x256xf32>
    %c5 = arith.constant 5 : index
    %c0_13 = arith.constant 0 : index
    %c0_14 = arith.constant 0 : index
    %32 = vector.load %arg2[%c5, %c0_13, %c0_14] : memref<9x4x256xf32, #tpu.memory_space<vmem>>, vector<1x4x256xf32>
    %33 = vector.shape_cast %32 : vector<1x4x256xf32> to vector<4x256xf32>
    %34 = vector.shape_cast %33 : vector<4x256xf32> to vector<1x4x256xf32>
    %35 = arith.mulf %31, %34 : vector<1x4x256xf32>
    %36 = arith.addf %30, %35 : vector<1x4x256xf32>
    %c241_i32 = arith.constant 241 : i32
    %37 = tpu.dynamic_rotate %0 by %c241_i32 dim 2 : vector<1x4x256xf32>, i32 -> vector<1x4x256xf32>
    %c6 = arith.constant 6 : index
    %c0_15 = arith.constant 0 : index
    %c0_16 = arith.constant 0 : index
    %38 = vector.load %arg2[%c6, %c0_15, %c0_16] : memref<9x4x256xf32, #tpu.memory_space<vmem>>, vector<1x4x256xf32>
    %39 = vector.shape_cast %38 : vector<1x4x256xf32> to vector<4x256xf32>
    %40 = vector.shape_cast %39 : vector<4x256xf32> to vector<1x4x256xf32>
    %41 = arith.mulf %37, %40 : vector<1x4x256xf32>
    %42 = arith.addf %36, %41 : vector<1x4x256xf32>
    %c240_i32 = arith.constant 240 : i32
    %43 = tpu.dynamic_rotate %0 by %c240_i32 dim 2 : vector<1x4x256xf32>, i32 -> vector<1x4x256xf32>
    %c7 = arith.constant 7 : index
    %c0_17 = arith.constant 0 : index
    %c0_18 = arith.constant 0 : index
    %44 = vector.load %arg2[%c7, %c0_17, %c0_18] : memref<9x4x256xf32, #tpu.memory_space<vmem>>, vector<1x4x256xf32>
    %45 = vector.shape_cast %44 : vector<1x4x256xf32> to vector<4x256xf32>
    %46 = vector.shape_cast %45 : vector<4x256xf32> to vector<1x4x256xf32>
    %47 = arith.mulf %43, %46 : vector<1x4x256xf32>
    %48 = arith.addf %42, %47 : vector<1x4x256xf32>
    %c239_i32 = arith.constant 239 : i32
    %49 = tpu.dynamic_rotate %0 by %c239_i32 dim 2 : vector<1x4x256xf32>, i32 -> vector<1x4x256xf32>
    %c8 = arith.constant 8 : index
    %c0_19 = arith.constant 0 : index
    %c0_20 = arith.constant 0 : index
    %50 = vector.load %arg2[%c8, %c0_19, %c0_20] : memref<9x4x256xf32, #tpu.memory_space<vmem>>, vector<1x4x256xf32>
    %51 = vector.shape_cast %50 : vector<1x4x256xf32> to vector<4x256xf32>
    %52 = vector.shape_cast %51 : vector<4x256xf32> to vector<1x4x256xf32>
    %53 = arith.mulf %49, %52 : vector<1x4x256xf32>
    %54 = arith.addf %48, %53 : vector<1x4x256xf32>
    %c0_21 = arith.constant 0 : index
    %c0_22 = arith.constant 0 : index
    %55 = vector.load %arg3[%c0_21, %c0_22] : memref<4x1xf32, #tpu.memory_space<vmem>>, vector<4x1xf32>
    %56 = vector.shape_cast %55 : vector<4x1xf32> to vector<1x4x1xf32>
    %57 = vector.broadcast %56 : vector<1x4x1xf32> to vector<1x4x256xf32>
    %58 = arith.addf %54, %57 : vector<1x4x256xf32>
    %c0_23 = arith.constant 0 : index
    %c0_24 = arith.constant 0 : index
    %59 = vector.load %arg4[%c0_23, %c0_24] : memref<8x4xf32, #tpu.memory_space<vmem>>, vector<8x4xf32>
    %c0_25 = arith.constant 0 : index
    %c0_26 = arith.constant 0 : index
    %60 = vector.load %arg5[%c0_25, %c0_26] : memref<8x1xf32, #tpu.memory_space<vmem>>, vector<8x1xf32>
    %61 = vector.shape_cast %58 : vector<1x4x256xf32> to vector<4x256xf32>
    %cst_27 = arith.constant dense<0.000000e+00> : vector<8x256xf32>
    %62 = tpu.matmul %59, %61, %cst_27 {dimension_numbers = #tpu.dot_dimension_numbers<[1], [0], [0], [1], [0, 0, 1, 1], [], []>} : vector<8x4xf32>, vector<4x256xf32>, vector<8x256xf32> -> vector<8x256xf32>
    %63 = vector.broadcast %60 : vector<8x1xf32> to vector<8x256xf32>
    %64 = arith.addf %62, %63 : vector<8x256xf32>
    %c0_28 = arith.constant 0 : index
    %c0_29 = arith.constant 0 : index
    %c0_30 = arith.constant 0 : index
    %65 = vector.load %arg6[%c0_28, %c0_29, %c0_30] : memref<1x8x256xf32, #tpu.memory_space<vmem>>, vector<1x8x256xf32>
    %66 = vector.shape_cast %65 : vector<1x8x256xf32> to vector<8x256xf32>
    %67 = vector.shape_cast %64 : vector<8x256xf32> to vector<1x8x256xf32>
    tpu.vector_store %arg6[%c0_28, %c0_29, %c0_30], %67 {strides = array<i32>} : memref<1x8x256xf32, #tpu.memory_space<vmem>>, vector<1x8x256xf32>,
    return
  }
  func.func @transform_0(%arg0: i32) -> (i32, i32, i32) {
    %c0_i32 = arith.constant 0 : i32
    %c0_i32_0 = arith.constant 0 : i32
    %c0_i32_1 = arith.constant 0 : i32
    return %arg0, %c0_i32, %c0_i32_0 : i32, i32, i32
  }
  func.func @transform_1(%arg0: i32) -> (i32, i32, i32) {
    %c0_i32 = arith.constant 0 : i32
    %c0_i32_0 = arith.constant 0 : i32
    %c0_i32_1 = arith.constant 0 : i32
    %c0_i32_2 = arith.constant 0 : i32
    return %c0_i32, %c0_i32_0, %c0_i32_1 : i32, i32, i32
  }
  func.func @transform_2(%arg0: i32) -> (i32, i32) {
    %c0_i32 = arith.constant 0 : i32
    %c0_i32_0 = arith.constant 0 : i32
    %c0_i32_1 = arith.constant 0 : i32
    return %c0_i32, %c0_i32_0 : i32, i32
  }
  func.func @transform_3(%arg0: i32) -> (i32, i32) {
    %c0_i32 = arith.constant 0 : i32
    %c0_i32_0 = arith.constant 0 : i32
    %c0_i32_1 = arith.constant 0 : i32
    return %c0_i32, %c0_i32_0 : i32, i32
  }
  func.func @transform_4(%arg0: i32) -> (i32, i32) {
    %c0_i32 = arith.constant 0 : i32
    %c0_i32_0 = arith.constant 0 : i32
    %c0_i32_1 = arith.constant 0 : i32
    return %c0_i32, %c0_i32_0 : i32, i32
  }
  func.func @transform_5(%arg0: i32) -> (i32, i32, i32) {
    %c0_i32 = arith.constant 0 : i32
    %c0_i32_0 = arith.constant 0 : i32
    %c0_i32_1 = arith.constant 0 : i32
    return %arg0, %c0_i32, %c0_i32_0 : i32, i32, i32
  }
}

</mosaic_0001>

<llo_original>
// kernel: tpu_custom_call.1
$region0: #{tpu_custom_call.1}
  #allocation0 [shape = 'u32[]', space=smem, size = 0x4, offset = 0x4, fixed_abs, tag = 'smem constant byte address 0x4 - core index']
  #allocation1 [shape = 'u32[144,128]{1,0:T(1,128)}', space=vmem, size = 0x12000, scoped, tag = 'internal scratch']
  %s0 = inlined_call_operand.vmem [shape: f32[2,4,256], index: 0, kind: input, shape index: {}]
  %s1 = inlined_call_operand.hbm [shape: f32[9,4,256], index: 1, kind: input, shape index: {}]
  %s2 = inlined_call_operand.vmem [shape: f32[4,1], index: 2, kind: input, shape index: {}]
  %s3 = inlined_call_operand.vmem [shape: f32[8,4], index: 3, kind: input, shape index: {}]
  %s4 = inlined_call_operand.vmem [shape: f32[8,1], index: 4, kind: input, shape index: {}]
  %s5 = inlined_call_operand.hbm [shape: f32[2,8,256], index: 5, kind: output, shape index: {}]
  %s6 = sld [smem:[#allocation0]]
  $region57: #{tpu_custom_call.1} parent=0
    _
  %s8 = ssub.s32 1, %s6
  %s9 = scalar_select 0, %s8, %s6
  $region1: #{tpu_custom_call.1} parent=0
    #allocation2 [shape = 'u8[36864]{0}', space=vmem, size = 0x9000, scoped, tag = 'input window, operand 1, single buffered']
    #allocation3 [shape = 's32[2]{0}', space=sflag, size = 0x8, scoped, tag = 'scoped memory for tpu_custom_call.1']
    #allocation4 [shape = 's32[2]{0}', space=sflag, size = 0x8, scoped, tag = 'scoped memory for tpu_custom_call.1']
    #allocation5 [shape = 'u8[16384]{0}', space=vmem, size = 0x4000, scoped, tag = 'output window, operand 0']
    %10 = vsyncpa [#allocation3], 0
    %11 = vsyncpa [#allocation4], 0
    %s12 = scalar_lea.sflag [#allocation4], 1
    %13 = vsyncpa %s12, 0
    loop: start=0, step=1, limit=4
    $region2: #{tpu_custom_call.1} parent=1 // loop_pre_header
      _
    $region3: #{tpu_custom_call.1} parent=1 // loop_header
      %s15 = sphi 0, %s19
      %p16 = scmp.ge.s32.totalorder %s15, 4
      %s25 = sphi 0, %s27
      %s28 = sphi 0, %s25
      %s29 = sphi 0, %s28
      %s45 = sphi 0, %s29
      %s49 = sphi 0, %s49
      %s51 = sphi 0, %s49
      %s52 = sphi 0, %s51
      %s66 = sphi 0, %s52
      %s70 = sphi 0, %s70
      %s72 = sphi 0, %s70
      %s73 = sphi 0, %s72
      %s87 = sphi 0, %s73
      %s91 = sphi 0, %s91
      %s93 = sphi 0, %s91
      %s94 = sphi 0, %s93
      %s108 = sphi 0, %s94
      %s112 = sphi 0, %s112
      %s114 = sphi 0, %s112
      %s115 = sphi 0, %s114
      %s129 = sphi 0, %s115
      %s135 = sphi 0, %s137
      %s138 = sphi 0, %s135
      %s139 = sphi 0, %s138
      %s155 = sphi 0, %s139
    $region4: #{tpu_custom_call.1} parent=1 // loop_header_branch
      %18 = sbr.rel (%p16) target = $region8
    $region5: #{tpu_custom_call.1} parent=1 // loop_body
      %s20 = ssub.s32 %s15, 1
      %s21 = ssub.s32 %s15, 2
      %s22 = sadd.s32 %s15, 1
      %s23 = ssub.s32 %s15, %s22
      %p24 = scmp.eq.s32.totalorder %s23, 0
      %s26 = sadd.s32 %s25, 1
      %s27 = scalar_select %p24, %s25, %s26
      %p30 = pneg %p24
      %p31 = scmp.eq.s32.totalorder %s15, 1
      %p32 = por %p30, %p31
      %p33 = scmp.ne.s32.totalorder %s25, %s28
      %p34 = scmp.eq.s32.totalorder %s15, 0
      %p35 = por %p33, %p34
      %p36 = scmp.ne.s32.totalorder %s25, %s28
      %p37 = scmp.eq.s32.totalorder %s20, 1
      %p38 = por %p36, %p37
      %p39 = scmp.ne.s32.totalorder %s28, %s29
      %p40 = scmp.eq.s32.totalorder %s20, 0
      %p41 = por %p39, %p40
      %p42 = scmp.ne.s32.totalorder %s28, %s29
      %p43 = scmp.eq.s32.totalorder %s21, 1
      %p44 = por %p42, %p43
      %p46 = scmp.ne.s32.totalorder %s29, %s45
      %p47 = scmp.eq.s32.totalorder %s21, 0
      %p48 = por %p46, %p47
      %s50 = sadd.s32 %s49, 1
      %p53 = scmp.eq.s32.totalorder %s15, 1
      %p54 = scmp.ne.s32.totalorder %s49, %s51
      %p55 = scmp.eq.s32.totalorder %s15, 0
      %p56 = por %p54, %p55
      %p57 = scmp.ne.s32.totalorder %s49, %s51
      %p58 = scmp.eq.s32.totalorder %s20, 1
      %p59 = por %p57, %p58
      %p60 = scmp.ne.s32.totalorder %s51, %s52
      %p61 = scmp.eq.s32.totalorder %s20, 0
      %p62 = por %p60, %p61
      %p63 = scmp.ne.s32.totalorder %s51, %s52
      %p64 = scmp.eq.s32.totalorder %s21, 1
      %p65 = por %p63, %p64
      %p67 = scmp.ne.s32.totalorder %s52, %s66
      %p68 = scmp.eq.s32.totalorder %s21, 0
      %p69 = por %p67, %p68
      %s71 = sadd.s32 %s70, 1
      %p74 = scmp.eq.s32.totalorder %s15, 1
      %p75 = scmp.ne.s32.totalorder %s70, %s72
      %p76 = scmp.eq.s32.totalorder %s15, 0
      %p77 = por %p75, %p76
      %p78 = scmp.ne.s32.totalorder %s70, %s72
      %p79 = scmp.eq.s32.totalorder %s20, 1
      %p80 = por %p78, %p79
      %p81 = scmp.ne.s32.totalorder %s72, %s73
      %p82 = scmp.eq.s32.totalorder %s20, 0
      %p83 = por %p81, %p82
      %p84 = scmp.ne.s32.totalorder %s72, %s73
      %p85 = scmp.eq.s32.totalorder %s21, 1
      %p86 = por %p84, %p85
      %p88 = scmp.ne.s32.totalorder %s73, %s87
      %p89 = scmp.eq.s32.totalorder %s21, 0
      %p90 = por %p88, %p89
      %s92 = sadd.s32 %s91, 1
      %p95 = scmp.eq.s32.totalorder %s15, 1
      %p96 = scmp.ne.s32.totalorder %s91, %s93
      %p97 = scmp.eq.s32.totalorder %s15, 0
      %p98 = por %p96, %p97
      %p99 = scmp.ne.s32.totalorder %s91, %s93
      %p100 = scmp.eq.s32.totalorder %s20, 1
      %p101 = por %p99, %p100
      %p102 = scmp.ne.s32.totalorder %s93, %s94
      %p103 = scmp.eq.s32.totalorder %s20, 0
      %p104 = por %p102, %p103
      %p105 = scmp.ne.s32.totalorder %s93, %s94
      %p106 = scmp.eq.s32.totalorder %s21, 1
      %p107 = por %p105, %p106
      %p109 = scmp.ne.s32.totalorder %s94, %s108
      %p110 = scmp.eq.s32.totalorder %s21, 0
      %p111 = por %p109, %p110
      %s113 = sadd.s32 %s112, 1
      %p116 = scmp.eq.s32.totalorder %s15, 1
      %p117 = scmp.ne.s32.totalorder %s112, %s114
      %p118 = scmp.eq.s32.totalorder %s15, 0
      %p119 = por %p117, %p118
      %p120 = scmp.ne.s32.totalorder %s112, %s114
      %p121 = scmp.eq.s32.totalorder %s20, 1
      %p122 = por %p120, %p121
      %p123 = scmp.ne.s32.totalorder %s114, %s115
      %p124 = scmp.eq.s32.totalorder %s20, 0
      %p125 = por %p123, %p124
      %p126 = scmp.ne.s32.totalorder %s114, %s115
      %p127 = scmp.eq.s32.totalorder %s21, 1
      %p128 = por %p126, %p127
      %p130 = scmp.ne.s32.totalorder %s115, %s129
      %p131 = scmp.eq.s32.totalorder %s21, 0
      %p132 = por %p130, %p131
      %s133 = ssub.s32 %s15, %s22
      %p134 = scmp.eq.s32.totalorder %s133, 0
      %s136 = sadd.s32 %s135, 1
      %s137 = scalar_select %p134, %s135, %s136
      %p140 = pneg %p134
      %p141 = scmp.eq.s32.totalorder %s15, 1
      %p142 = por %p140, %p141
      %p143 = scmp.ne.s32.totalorder %s135, %s138
      %p144 = scmp.eq.s32.totalorder %s15, 0
      %p145 = por %p143, %p144
      %p146 = scmp.ne.s32.totalorder %s135, %s138
      %p147 = scmp.eq.s32.totalorder %s20, 1
      %p148 = por %p146, %p147
      %p149 = scmp.ne.s32.totalorder %s138, %s139
      %p150 = scmp.eq.s32.totalorder %s20, 0
      %p151 = por %p149, %p150
      %p152 = scmp.ne.s32.totalorder %s138, %s139
      %p153 = scmp.eq.s32.totalorder %s21, 1
      %p154 = por %p152, %p153
      %p156 = scmp.ne.s32.totalorder %s139, %s155
      %p157 = scmp.eq.s32.totalorder %s21, 0
      %p158 = por %p156, %p157
      %p159 = scmp.le.s32.totalorder 1, %s15
      %p160 = scmp.lt.s32.totalorder %s15, 3
      %p161 = pnand %p159, %p160
      %p162 = pneg %p161
      // Predicated region
      $region9: #{tpu_custom_call.1} parent=5 // pred_check
        _
      $region10: #{tpu_custom_call.1} parent=5 // pred_check_branch
        %164 = sbr.rel (%p161) target = $region12
      $region11: #{tpu_custom_call.1} parent=5 // pred_region
        %s165 = ssub.s32 %s15, 1
        // Predicated region
        $region13: #{tpu_custom_call.1} parent=11 // pred_check
          %p166 = pneg %p62
        $region14: #{tpu_custom_call.1} parent=11 // pred_check_branch
          %168 = sbr.rel (%p166) target = $region16
        $region15: #{tpu_custom_call.1} parent=11 // pred_region
          %s170 = ssub.s32 1152, 1152
          %171 = vsyncadd [#allocation3], %s170
          %s172 = sshll.u32 [#allocation2], 4
          %s173 = int_to_ptr.vmem [resolvable:$true] %s172
          %178 = dma.hbm_to_vmem [thread:$0]  %s1, 1152, %s173, [#allocation3], 128, 128, 8
        $region16: #{tpu_custom_call.1} parent=11 // pred_fallthru
          _
        // Predicated region
        $region17: #{tpu_custom_call.1} parent=11 // pred_check
          %p179 = pneg %p83
        $region18: #{tpu_custom_call.1} parent=11 // pred_check_branch
          %181 = sbr.rel (%p179) target = $region20
        $region19: #{tpu_custom_call.1} parent=11 // pred_region
          _
        $region20: #{tpu_custom_call.1} parent=11 // pred_fallthru
          _
        // Predicated region
        $region21: #{tpu_custom_call.1} parent=11 // pred_check
          %p182 = pneg %p104
        $region22: #{tpu_custom_call.1} parent=11 // pred_check_branch
          %184 = sbr.rel (%p182) target = $region24
        $region23: #{tpu_custom_call.1} parent=11 // pred_region
          _
        $region24: #{tpu_custom_call.1} parent=11 // pred_fallthru
          _
        // Predicated region
        $region25: #{tpu_custom_call.1} parent=11 // pred_check
          %p185 = pneg %p125
        $region26: #{tpu_custom_call.1} parent=11 // pred_check_branch
          %187 = sbr.rel (%p185) target = $region28
        $region27: #{tpu_custom_call.1} parent=11 // pred_region
          _
        $region28: #{tpu_custom_call.1} parent=11 // pred_fallthru
          _
      $region12: #{tpu_custom_call.1} parent=5 // pred_fallthru
        _
      %p188 = scmp.lt.s32.totalorder %s15, 2
      // Predicated region
      $region29: #{tpu_custom_call.1} parent=5 // pred_check
        %p189 = pneg %p188
      $region30: #{tpu_custom_call.1} parent=5 // pred_check_branch
        %191 = sbr.rel (%p189) target = $region32
      $region31: #{tpu_custom_call.1} parent=5 // pred_region
        // Predicated region
        $region33: #{tpu_custom_call.1} parent=31 // pred_check
          %p192 = pneg %p35
        $region34: #{tpu_custom_call.1} parent=31 // pred_check_branch
          %194 = sbr.rel (%p192) target = $region36
        $region35: #{tpu_custom_call.1} parent=31 // pred_region
          %p195 = scmp.lt.s32.totalorder %s15, 1
          %s196 = scalar_select %p195, %s15, 1
          %s197 = smul.addr %s196, 2
          %s198 = smul.addr %s197, 4
          %s199 = scalar_lea.vmem %s0, %s198
        $region36: #{tpu_custom_call.1} parent=31 // pred_fallthru
          _
      $region32: #{tpu_custom_call.1} parent=5 // pred_fallthru
        _
      %p200 = scmp.le.s32.totalorder 1, %s15
      %p201 = scmp.lt.s32.totalorder %s15, 3
      %p202 = pnand %p200, %p201
      %p203 = pneg %p202
      // Predicated region
      $region37: #{tpu_custom_call.1} parent=5 // pred_check
        _
      $region38: #{tpu_custom_call.1} parent=5 // pred_check_branch
        %205 = sbr.rel (%p202) target = $region40
      $region39: #{tpu_custom_call.1} parent=5 // pred_region
        %s206 = ssub.s32 %s15, 1
        // Predicated region
        $region41: #{tpu_custom_call.1} parent=39 // pred_check
          %p207 = pneg %p62
        $region42: #{tpu_custom_call.1} parent=39 // pred_check_branch
          %209 = sbr.rel (%p207) target = $region44
        $region43: #{tpu_custom_call.1} parent=39 // pred_region
          %210 = dma.done [#allocation3], 1152
        $region44: #{tpu_custom_call.1} parent=39 // pred_fallthru
          _
        %p211 = scmp.lt.s32.totalorder %s20, 1
        %s212 = scalar_select %p211, %s20, 1
        %s213 = smul.addr %s212, 2
        %s214 = smul.addr %s213, 4
        %s215 = scalar_lea.vmem %s0, %s214
        %p216 = pneg %p41
        %p217 = pneg %p38
        %p218 = pneg %p62
        %p219 = pneg %p59
        %p220 = pneg %p83
        %p221 = pneg %p80
        %p222 = pneg %p104
        %p223 = pneg %p101
        %p224 = pneg %p125
        %p225 = pneg %p122
        %p226 = pneg %p151
        %p227 = pneg %p148
        %s228 = sand.u32 %s138, 1
        %s229 = scalar_lea.sflag [#allocation4], %s228
        %s230 = sand.u32 %s138, 1
        %s231 = smul.addr %s230, 16
        %s232 = scalar_lea.vmem [#allocation5], %s231
        %p233 = scmp.lt.s32.totalorder %s20, 1
        %s234 = scalar_select %p233, %s20, 1
        %s235 = smul.addr %s234, 2
        %s236 = smul.addr %s235, 4
        %s237 = scalar_lea.vmem %s0, %s236
        %v238 = vld [vmem:[%s237] sm:$0xff]
        %v240 = vcombine.high %v238, %v238
        %242 = vrot.lane.b32.xlu0 %v238, 17
        %v243 = vpop.permute.xlu0 %242
        %244 = vrot.lane.b32.xlu0 %v240, 17
        %v245 = vpop.permute.xlu0 %244
        %v246 = vlaneseq
        %v247 = vand.u32 %v246, 127
        %vm248 = vcmp.lt.s32.totalorder %v247, 17
        %v249 = vsel %vm248, %v243, %v245
        %v250 = vsel %vm248, %v245, %v243
        %v251 = vld [vmem:[#allocation2] sm:$0xff]
        %v253 = vcombine.high %v251, %v251
        %v255 = vmul.f32 %v250, %v251
        %v256 = vmul.f32 %v249, %v253
        %v257 = vadd.f32 %v255, 0.0
        %v258 = vadd.f32 %v256, 0.0
        %259 = vrot.lane.b32.xlu0 %v238, 16
        %v260 = vpop.permute.xlu0 %259
        %261 = vrot.lane.b32.xlu0 %v240, 16
        %v262 = vpop.permute.xlu0 %261
        %vm263 = vcmp.lt.s32.totalorder %v247, 16
        %v264 = vsel %vm263, %v260, %v262
        %v265 = vsel %vm263, %v262, %v260
        %s266 = scalar_lea.vmem [#allocation2], 8
        %v267 = vld [vmem:[%s266] sm:$0xff]
        %v269 = vcombine.high %v267, %v267
        %v271 = vmul.f32 %v265, %v267
        %v272 = vmul.f32 %v264, %v269
        %v273 = vadd.f32 %v257, %v271
        %v274 = vadd.f32 %v258, %v272
        %275 = vrot.lane.b32.xlu0 %v238, 15
        %v276 = vpop.permute.xlu0 %275
        %277 = vrot.lane.b32.xlu0 %v240, 15
        %v278 = vpop.permute.xlu0 %277
        %vm279 = vcmp.lt.s32.totalorder %v247, 15
        %v280 = vsel %vm279, %v276, %v278
        %v281 = vsel %vm279, %v278, %v276
        %s282 = scalar_lea.vmem [#allocation2], 16
        %v283 = vld [vmem:[%s282] sm:$0xff]
        %v285 = vcombine.high %v283, %v283
        %v287 = vmul.f32 %v281, %v283
        %v288 = vmul.f32 %v280, %v285
        %v289 = vadd.f32 %v273, %v287
        %v290 = vadd.f32 %v274, %v288
        %291 = vrot.lane.b32.xlu0 %v238, 1
        %v292 = vpop.permute.xlu0 %291
        %293 = vrot.lane.b32.xlu0 %v240, 1
        %v294 = vpop.permute.xlu0 %293
        %vm295 = vcmp.lt.s32.totalorder %v247, 1
        %v296 = vsel %vm295, %v292, %v294
        %v297 = vsel %vm295, %v294, %v292
        %s298 = scalar_lea.vmem [#allocation2], 24
        %v299 = vld [vmem:[%s298] sm:$0xff]
        %v301 = vcombine.high %v299, %v299
        %v303 = vmul.f32 %v297, %v299
        %v304 = vmul.f32 %v296, %v301
        %v305 = vadd.f32 %v289, %v303
        %v306 = vadd.f32 %v290, %v304
        %s307 = scalar_lea.vmem [#allocation2], 32
        %v308 = vld [vmem:[%s307] sm:$0xff]
        %v309 = vmul.f32 %v238, %v308
        %v311 = vcombine.high %v309, %v309
        %v313 = vadd.f32 %v305, %v309
        %v314 = vadd.f32 %v306, %v311
        %315 = vrot.lane.b32.xlu0 %v238, 127
        %v316 = vpop.permute.xlu0 %315
        %317 = vrot.lane.b32.xlu0 %v240, 127
        %v318 = vpop.permute.xlu0 %317
        %vm319 = vcmp.lt.s32.totalorder %v247, 127
        %v320 = vsel %vm319, %v316, %v318
        %v321 = vsel %vm319, %v318, %v316
        %s322 = scalar_lea.vmem [#allocation2], 40
        %v323 = vld [vmem:[%s322] sm:$0xff]
        %v325 = vcombine.high %v323, %v323
        %v327 = vmul.f32 %v320, %v323
        %v328 = vmul.f32 %v321, %v325
        %v329 = vadd.f32 %v313, %v327
        %v330 = vadd.f32 %v314, %v328
        %331 = vrot.lane.b32.xlu0 %v238, 113
        %v332 = vpop.permute.xlu0 %331
        %333 = vrot.lane.b32.xlu0 %v240, 113
        %v334 = vpop.permute.xlu0 %333
        %vm335 = vcmp.lt.s32.totalorder %v247, 113
        %v336 = vsel %vm335, %v332, %v334
        %v337 = vsel %vm335, %v334, %v332
        %s338 = scalar_lea.vmem [#allocation2], 48
        %v339 = vld [vmem:[%s338] sm:$0xff]
        %v341 = vcombine.high %v339, %v339
        %v343 = vmul.f32 %v336, %v339
        %v344 = vmul.f32 %v337, %v341
        %v345 = vadd.f32 %v329, %v343
        %v346 = vadd.f32 %v330, %v344
        %347 = vrot.lane.b32.xlu0 %v238, 112
        %v348 = vpop.permute.xlu0 %347
        %349 = vrot.lane.b32.xlu0 %v240, 112
        %v350 = vpop.permute.xlu0 %349
        %vm351 = vcmp.lt.s32.totalorder %v247, 112
        %v352 = vsel %vm351, %v348, %v350
        %v353 = vsel %vm351, %v350, %v348
        %s354 = scalar_lea.vmem [#allocation2], 56
        %v355 = vld [vmem:[%s354] sm:$0xff]
        %v357 = vcombine.high %v355, %v355
        %v359 = vmul.f32 %v352, %v355
        %v360 = vmul.f32 %v353, %v357
        %v361 = vadd.f32 %v345, %v359
        %v362 = vadd.f32 %v346, %v360
        %363 = vrot.lane.b32.xlu0 %v238, 111
        %v364 = vpop.permute.xlu0 %363
        %365 = vrot.lane.b32.xlu0 %v240, 111
        %v366 = vpop.permute.xlu0 %365
        %vm367 = vcmp.lt.s32.totalorder %v247, 111
        %v368 = vsel %vm367, %v364, %v366
        %v369 = vsel %vm367, %v366, %v364
        %s370 = scalar_lea.vmem [#allocation2], 64
        %v371 = vld [vmem:[%s370] sm:$0xff]
        %v373 = vcombine.high %v371, %v371
        %v375 = vmul.f32 %v368, %v371
        %v376 = vmul.f32 %v369, %v373
        %v377 = vadd.f32 %v361, %v375
        %v378 = vadd.f32 %v362, %v376
        %v379 = vld [vmem:[%s2] sm:$0xf]
        %381 = vset.pattern.permute.xlu0 0
        %382 = vperm.xlu0 %381, %v379
        %v383 = vpop.permute.xlu0 %382
        %v385 = vadd.f32 %v377, %v383
        %v386 = vadd.f32 %v378, %v383
        %v387 = vld [vmem:[%s3] sm:$0xff]
        %v388 = vld [vmem:[%s4] sm:$0xff]
        %390 = vset.pattern.permute.xlu0 0
        %391 = vperm.xlu0 %390, %v388
        %v392 = vpop.permute.xlu0 %391
        %vm394 = vcmask 31744
        %v396 = vsel %vm394, %v387, 0
        %vm398 = vcmask 1043456
        %v400 = vsel %vm398, %v385, 0
        %v403 = vsel %vm398, %v386, 0
        %405 = vmatprep.subr.mxu0 %v403
        %406 = vmatpush1.msra.mxu0 %v400
        %407 = vmatprep.subr.mxu0 0.0
        %408 = vmatpush1.msra.mxu0 0.0
        %409 = vmatprep.subr.mxu0 0.0
        %410 = vmatpush1.msra.mxu0 0.0
        %411 = vmatprep.subr.mxu0 0.0
        %412 = vmatpush1.msra.mxu0 0.0
        %413 = vmatprep.subr.mxu0 0.0
        %414 = vmatpush1.msra.mxu0 0.0
        %415 = vmatprep.subr.mxu0 0.0
        %416 = vmatpush1.msra.mxu0 0.0
        %417 = vmatprep.subr.mxu0 0.0
        %418 = vmatpush1.msra.mxu0 0.0
        %419 = vmatprep.subr.mxu0 0.0
        %420 = vmatpush1.msra.mxu0 0.0
        %421 = vmatprep.subr.mxu0 0.0
        %422 = vmatpush1.msra.mxu0 0.0
        %423 = vmatprep.subr.mxu0 0.0
        %424 = vmatpush1.msra.mxu0 0.0
        %425 = vmatprep.subr.mxu0 0.0
        %426 = vmatpush1.msra.mxu0 0.0
        %427 = vmatprep.subr.mxu0 0.0
        %428 = vmatpush1.msra.mxu0 0.0
        %429 = vmatprep.subr.mxu0 0.0
        %430 = vmatpush1.msra.mxu0 0.0
        %431 = vmatprep.subr.mxu0 0.0
        %432 = vmatpush1.msra.mxu0 0.0
        %433 = vmatprep.subr.mxu0 0.0
        %434 = vmatpush1.msra.mxu0 0.0
        %435 = vmatprep.subr.mxu0 0.0
        %436 = vmatpush1.msra.mxu0 0.0
        %437 = vmatprep.subr.mxu0 0.0
        %438 = vmatpush1.msra.mxu0 0.0
        %439 = vmatprep.subr.mxu0 0.0
        %440 = vmatpush1.msra.mxu0 0.0
        %441 = vmatprep.subr.mxu0 0.0
        %442 = vmatpush1.msra.mxu0 0.0
        %443 = vmatprep.subr.mxu0 0.0
        %444 = vmatpush1.msra.mxu0 0.0
        %445 = vmatprep.subr.mxu0 0.0
        %446 = vmatpush1.msra.mxu0 0.0
        %447 = vmatprep.subr.mxu0 0.0
        %448 = vmatpush1.msra.mxu0 0.0
        %449 = vmatprep.subr.mxu0 0.0
        %450 = vmatpush1.msra.mxu0 0.0
        %451 = vmatprep.subr.mxu0 0.0
        %452 = vmatpush1.msra.mxu0 0.0
        %453 = vmatprep.subr.mxu0 0.0
        %454 = vmatpush1.msra.mxu0 0.0
        %455 = vmatprep.subr.mxu0 0.0
        %456 = vmatpush1.msra.mxu0 0.0
        %457 = vmatprep.subr.mxu0 0.0
        %458 = vmatpush1.msra.mxu0 0.0
        %459 = vmatprep.subr.mxu0 0.0
        %460 = vmatpush1.msra.mxu0 0.0
        %461 = vmatprep.subr.mxu0 0.0
        %462 = vmatpush1.msra.mxu0 0.0
        %463 = vmatprep.subr.mxu0 0.0
        %464 = vmatpush1.msra.mxu0 0.0
        %465 = vmatprep.subr.mxu0 0.0
        %466 = vmatpush1.msra.mxu0 0.0
        %467 = vmatprep.subr.mxu0 0.0
        %468 = vmatpush1.msra.mxu0 0.0
        %469 = vmatprep.mubr.f32.mxu0 0.0
        %470 = vmatmul.mubr.f32.gmra.mrb[0].mxu0 %v396
        %v471 = vpop.f32.mrb[0].mxu0
        %v472 = vadd.f32 %v392, %v471
        %v473 = vpop.f32.mrb[0].mxu0
        %v474 = vadd.f32 %v392, %v473
        %475 = vdwg.mxu0
        %476 = vst [vmem:[%s232] sm:$0xff] %v472
        %477 = vst [vmem:[%s232 + $0x8] sm:$0xff] %v474
        %s478 = sand.u32 %s138, 1
        %s479 = scalar_lea.sflag [#allocation4], %s478
        %s480 = sand.u32 %s138, 1
        %s481 = smul.addr %s480, 16
        %s482 = scalar_lea.vmem [#allocation5], %s481
        // Predicated region
        $region45: #{tpu_custom_call.1} parent=39 // pred_check
          %p483 = pneg %p148
        $region46: #{tpu_custom_call.1} parent=39 // pred_check_branch
          %485 = sbr.rel (%p483) target = $region48
        $region47: #{tpu_custom_call.1} parent=39 // pred_region
          %s487 = ssub.s32 256, 256
          %488 = vsyncadd %s479, %s487
          %s489 = smul.addr %s20, 2
          %s490 = smul.addr %s489, 128
          %s491 = scalar_lea.hbm %s5, %s490
          %s493 = sshll.u32 %s482, 4
          %s494 = int_to_ptr.vmem [resolvable:$true] %s493
          %496 = dma.vmem_to_hbm [thread:$0]  %s494, 256, %s491, %s479
        $region48: #{tpu_custom_call.1} parent=39 // pred_fallthru
          _
      $region40: #{tpu_custom_call.1} parent=5 // pred_fallthru
        _
      %p497 = scmp.le.s32.totalorder 2, %s15
      // Predicated region
      $region49: #{tpu_custom_call.1} parent=5 // pred_check
        %p498 = pneg %p497
      $region50: #{tpu_custom_call.1} parent=5 // pred_check_branch
        %500 = sbr.rel (%p498) target = $region52
      $region51: #{tpu_custom_call.1} parent=5 // pred_region
        %s501 = ssub.s32 %s15, 2
        // Predicated region
        $region53: #{tpu_custom_call.1} parent=51 // pred_check
          %p502 = pneg %p154
        $region54: #{tpu_custom_call.1} parent=51 // pred_check_branch
          %504 = sbr.rel (%p502) target = $region56
        $region55: #{tpu_custom_call.1} parent=51 // pred_region
          %s505 = sand.u32 %s139, 1
          %s506 = scalar_lea.sflag [#allocation4], %s505
          %s507 = sand.u32 %s139, 1
          %s508 = smul.addr %s507, 16
          %s509 = scalar_lea.vmem [#allocation5], %s508
          %510 = dma.done %s506, 256
        $region56: #{tpu_custom_call.1} parent=51 // pred_fallthru
          _
      $region52: #{tpu_custom_call.1} parent=5 // pred_fallthru
        _
    $region6: #{tpu_custom_call.1} parent=1 // loop_footer
      %s19 = sadd.s32 1, %s15
    $region7: #{tpu_custom_call.1} parent=1 // loop_footer_branch
      %14 = sbr.rel target = $region3
    $region8: #{tpu_custom_call.1} parent=1 // loop_exit
      _
    %511 = vsyncpa [#allocation3], 1
    %s512 = scalar_lea.sflag [#allocation3], 1
    %513 = vsyncpa %s512, 1
    %514 = vsyncpa [#allocation4], 1
    %s515 = scalar_lea.sflag [#allocation4], 1
    %516 = vsyncpa %s515, 1

</llo_original>
